<compile_context>
chip_gen: v6e
topology: v6e:2x2x1
jax: 0.10.0
libtpu: 0.0.40
codegen_flags: <defaults>
</compile_context>

<pallas_src>
import functools

import jax
import jax.numpy as jnp
from jax.experimental import pallas as pl
from jax.experimental.pallas import tpu as pltpu

_LANE = 128          # lane width (last dim of every tile)
_BF16_SUBLANE = 16   # bf16 packs 16 rows per sublane group


def _round_up(v: int, m: int) -> int:
    return ((v + m - 1) // m) * m


def _vmem_capacity_bytes() -> int:
    """Per-TensorCore VMEM capacity; conservative 64 MiB (v7x) if unknown."""
    try:
        info = pltpu.get_tpu_info()
        cap = getattr(info, "vmem_capacity_bytes", None)
        if cap:
            return int(cap)
    except Exception:
        pass
    return 64 << 20


def _activation(v, non_linearity: str):
    if non_linearity == "relu":
        return jnp.maximum(v, 0.0)
    if non_linearity == "sigmoid":
        # exp and approximate reciprocal both lower to the EUP slot -> the
        # whole sigmoid stays off the VALU (which carries the bias adds).
        return pl.reciprocal(1.0 + jnp.exp(-v), approx=True)
    raise NotImplementedError(non_linearity)


# ---------------------------------------------------------------------------
# One-time parameter packing (pad to 128 lanes, cast weights to bf16).
# ---------------------------------------------------------------------------
def pack_params(params, mxu_dtype=jnp.bfloat16):
    """Pad w1..w4 ([in,out]) / b1..b4 ([1,out]) to 128-lane multiples once.

    Weights go to `mxu_dtype` (bf16: native MXU rate, half the weight DMA);
    biases stay f32 so the adds / activations keep full precision. Padded
    rows/cols are zero, so padded features never leak into real outputs.
    """
    def pad2(a, rows, cols, dtype):
        a = jnp.asarray(a, dtype)
        pr, pc = rows - a.shape[0], cols - a.shape[1]
        return jnp.pad(a, ((0, pr), (0, pc))) if (pr or pc) else a

    d_in = _round_up(params["w1"].shape[0], _LANE)
    d_h = _round_up(params["w1"].shape[1], _LANE)
    d_out = _round_up(params["w4"].shape[1], _LANE)
    return {
        "w1": pad2(params["w1"], d_in, d_h, mxu_dtype),
        "w2": pad2(params["w2"], d_h, d_h, mxu_dtype),
        "w3": pad2(params["w3"], d_h, d_h, mxu_dtype),
        "w4": pad2(params["w4"], d_h, d_out, mxu_dtype),
        "b1": pad2(params["b1"], 1, d_h, jnp.float32),
        "b2": pad2(params["b2"], 1, d_h, jnp.float32),
        "b3": pad2(params["b3"], 1, d_h, jnp.float32),
        "b4": pad2(params["b4"], 1, d_out, jnp.float32),
    }


# ---------------------------------------------------------------------------
# Fused path: all four layers in one kernel, weights resident in VMEM.
# ---------------------------------------------------------------------------
def _fused_mlp_kernel(x_ref,
                      w1_ref, b1_ref, w2_ref, b2_ref,
                      w3_ref, b3_ref, w4_ref, b4_ref,
                      o_ref, *, non_linearity, mxu_dtype):
    def hidden(h, w_ref, b_ref):
        out = jnp.dot(h, w_ref[...], preferred_element_type=jnp.float32)
        out = out + b_ref[...]
        # Cast back to bf16 at activation time: numerically identical (the
        # cast happens before the next MXU either way) but halves the live
        # intermediate footprint between layers.
        return _activation(out, non_linearity).astype(mxu_dtype)

    h = x_ref[...].astype(mxu_dtype)        # in-kernel cast, no wrapper pass
    h = hidden(h, w1_ref, b1_ref)
    h = hidden(h, w2_ref, b2_ref)
    h = hidden(h, w3_ref, b3_ref)
    out = jnp.dot(h, w4_ref[...], preferred_element_type=jnp.float32)
    out = out + b4_ref[...]
    o_ref[...] = out.astype(o_ref.dtype)


# ---------------------------------------------------------------------------
# Tiled fallback: one Linear(+act) per pallas_call with a K-reduction axis.
# Used when resident weights would not fit ~half of VMEM (e.g. v7x, big d_h).
# ---------------------------------------------------------------------------
def _linear_kernel(x_ref, w_ref, b_ref, o_ref, acc_ref, *,
                   apply_act, non_linearity):
    k = pl.program_id(2)

    @pl.when(k == 0)
    def _():
        acc_ref[...] = jnp.zeros_like(acc_ref)

    acc_ref[...] += jnp.dot(x_ref[...].astype(w_ref.dtype), w_ref[...],
                            preferred_element_type=jnp.float32)

    @pl.when(k == pl.num_programs(2) - 1)
    def _():
        out = acc_ref[...] + b_ref[...]
        if apply_act:
            out = _activation(out, non_linearity)
        o_ref[...] = out.astype(o_ref.dtype)


def _pick_divisor(total: int, cap: int) -> int:
    """Largest multiple of 128 <= cap that divides `total` (a 128 multiple)."""
    t = min(cap, total)
    while total % t:
        t -= _LANE
    return t


def _tiled_linear(x_p, w_p, b_p, *, apply_act, non_linearity, out_dtype, tm):
    M, K = x_p.shape
    _, N = w_p.shape
    tk = _pick_divisor(K, 512)
    tn = _pick_divisor(N, 256)
    grid = (M // tm, N // tn, K // tk)
    kernel = functools.partial(_linear_kernel, apply_act=apply_act,
                               non_linearity=non_linearity)
    return pl.pallas_call(
        kernel,
        out_shape=jax.ShapeDtypeStruct((M, N), out_dtype),
        grid_spec=pltpu.PrefetchScalarGridSpec(
            num_scalar_prefetch=0,
            grid=grid,
            in_specs=[
                pl.BlockSpec((tm, tk), lambda i, j, k: (i, k)),
                pl.BlockSpec((tk, tn), lambda i, j, k: (k, j)),
                pl.BlockSpec((1, tn), lambda i, j, k: (0, j)),
            ],
            out_specs=pl.BlockSpec((tm, tn), lambda i, j, k: (i, j)),
            scratch_shapes=[pltpu.VMEM((tm, tn), jnp.float32)],
        ),
        compiler_params=pltpu.CompilerParams(
            dimension_semantics=("parallel", "parallel", "arbitrary")),
    )(x_p, w_p, b_p)


# ---------------------------------------------------------------------------
# Forward pass.
# ---------------------------------------------------------------------------
def deep_ffnn_forward(x, packed, *, output_dim, non_linearity="relu",
                      mode="auto", batch_tile=None):
    """x: [B, input_dim] float. `packed` = pack_params(params)."""
    B, input_dim = x.shape
    mxu_dtype = packed["w1"].dtype
    d_in, d_h = packed["w1"].shape
    d_out = packed["w4"].shape[1]
    out_dtype = x.dtype
    x_item = jnp.dtype(x.dtype).itemsize
    out_item = jnp.dtype(out_dtype).itemsize

    w_bytes = sum(int(a.size) * a.dtype.itemsize for a in packed.values())
    vmem_cap = _vmem_capacity_bytes()

    if mode == "auto":
        # Keep all weights resident only if they leave ~half of VMEM for the
        # double-buffered x/out tiles and the live intermediates.
        mode = "fused" if w_bytes <= 0.45 * vmem_cap else "tiled"

    if mode == "fused":
        if batch_tile is None:
            # Single grid step for B <= 512 (grid is a serial loop on 1-TC
            # chips); 512-row (multiple-of-256) tiles for large B; shrink if
            # the resident weights squeeze the VMEM budget (v7x: 64 MiB).
            tile = min(512, _round_up(B, _BF16_SUBLANE))
            budget = vmem_cap - w_bytes - (6 << 20)

            def need(t):
                # double-buffered x & out tiles + live f32/bf16 intermediates
                return (2 * t * d_in * x_item + 2 * t * d_out * out_item
                        + t * d_h * 8)

            while tile > _BF16_SUBLANE and need(tile) > budget:
                tile = max(_BF16_SUBLANE, _round_up(tile // 2, _BF16_SUBLANE))
            batch_tile = tile
        assert batch_tile % _BF16_SUBLANE == 0, "batch_tile must be a multiple of 16"

        b_pad = _round_up(B, batch_tile)
        if b_pad != B or d_in != input_dim:
            x_p = jnp.pad(x, ((0, b_pad - B), (0, d_in - input_dim)))
        else:
            x_p = x                      # no wrapper pass when already aligned
        grid_steps = b_pad // batch_tile

        # Megacore sharding duplicates the resident weights in each TC's VMEM;
        # only worth it when the activation traffic amortizes that.
        x_total_bytes = b_pad * d_in * x_item
        semantics = ("parallel",) if (grid_steps >= 2 and x_total_bytes >= w_bytes) \
            else ("arbitrary",)

        def resident_spec(arr):
            # Constant index map -> fetched once; single-buffered (weights
            # never change across the grid, so double-buffering wastes VMEM).
            return pl.BlockSpec(arr.shape, lambda i: (0, 0),
                                pipeline_mode=pl.Buffered(1))

        in_specs = [
            pl.BlockSpec((batch_tile, d_in), lambda i: (i, 0)),
            resident_spec(packed["w1"]), resident_spec(packed["b1"]),
            resident_spec(packed["w2"]), resident_spec(packed["b2"]),
            resident_spec(packed["w3"]), resident_spec(packed["b3"]),
            resident_spec(packed["w4"]), resident_spec(packed["b4"]),
        ]
        out_specs = pl.BlockSpec((batch_tile, d_out), lambda i: (i, 0))

        flops = 2 * b_pad * (d_in * d_h + 2 * d_h * d_h + d_h * d_out)
        transcendentals = (6 * b_pad * d_h) if non_linearity == "sigmoid" else 0
        bytes_accessed = (b_pad * d_in * x_item + w_bytes
                          + b_pad * d_out * out_item)

        # Accurate budget: resident weights (1x) + double-buffered x/out tiles
        # + live intermediates + margin, capped at the chip's real VMEM.
        vmem_needed = (w_bytes
                       + 2 * batch_tile * d_in * x_item
                       + 2 * batch_tile * d_out * out_item
                       + batch_tile * d_h * 8
                       + (4 << 20))
        vmem_limit = int(min(vmem_cap, max(vmem_needed, 32 << 20)))

        kernel = functools.partial(_fused_mlp_kernel,
                                   non_linearity=non_linearity,
                                   mxu_dtype=mxu_dtype)
        out_padded = pl.pallas_call(
            kernel,
            out_shape=jax.ShapeDtypeStruct((b_pad, d_out), out_dtype),
            grid_spec=pltpu.PrefetchScalarGridSpec(
                num_scalar_prefetch=0,
                grid=(grid_steps,),
                in_specs=in_specs,
                out_specs=out_specs,
            ),
            compiler_params=pltpu.CompilerParams(
                dimension_semantics=semantics,
                vmem_limit_bytes=vmem_limit,
            ),
            cost_estimate=pl.CostEstimate(
                flops=flops,
                transcendentals=transcendentals,
                bytes_accessed=bytes_accessed),
        )(x_p, packed["w1"], packed["b1"], packed["w2"], packed["b2"],
          packed["w3"], packed["b3"], packed["w4"], packed["b4"])
        return out_padded[:B, :output_dim]

    # ---- tiled fallback (weights too large to keep resident) ----
    if batch_tile is None:
        batch_tile = min(256, _round_up(B, _BF16_SUBLANE))
    assert batch_tile % _BF16_SUBLANE == 0
    b_pad = _round_up(B, batch_tile)
    if b_pad != B or d_in != input_dim:
        x_p = jnp.pad(x, ((0, b_pad - B), (0, d_in - input_dim)))
    else:
        x_p = x
    h = _tiled_linear(x_p, packed["w1"], packed["b1"], apply_act=True,
                      non_linearity=non_linearity, out_dtype=mxu_dtype,
                      tm=batch_tile)
    h = _tiled_linear(h, packed["w2"], packed["b2"], apply_act=True,
                      non_linearity=non_linearity, out_dtype=mxu_dtype,
                      tm=batch_tile)
    h = _tiled_linear(h, packed["w3"], packed["b3"], apply_act=True,
                      non_linearity=non_linearity, out_dtype=mxu_dtype,
                      tm=batch_tile)
    out = _tiled_linear(h, packed["w4"], packed["b4"], apply_act=False,
                        non_linearity=non_linearity, out_dtype=out_dtype,
                        tm=batch_tile)
    return out[:B, :output_dim]


# ---------------------------------------------------------------------------
# Init / reference / test.
# ---------------------------------------------------------------------------
def init_params(key, input_dim, hidden_dim, output_dim, dtype=jnp.float32):
    """Mimics nn.Linear's default U(-1/sqrt(fan_in), 1/sqrt(fan_in)) init."""
    dims = [(input_dim, hidden_dim), (hidden_dim, hidden_dim),
            (hidden_dim, hidden_dim), (hidden_dim, output_dim)]
    params = {}
    for idx, (fan_in, fan_out) in enumerate(dims, start=1):
        key, kw, kb = jax.random.split(key, 3)
        bound = 1.0 / float(fan_in) ** 0.5
        # stored as [in, out] (transposed relative to PyTorch's [out, in])
        params[f"w{idx}"] = jax.random.uniform(
            kw, (fan_in, fan_out), dtype, minval=-bound, maxval=bound)
        params[f"b{idx}"] = jax.random.uniform(
            kb, (1, fan_out), dtype, minval=-bound, maxval=bound)
    return params


def _reference_forward(x, params, non_linearity="relu"):
    act = (lambda v: jnp.maximum(v, 0.0)) if non_linearity == "relu" \
        else jax.nn.sigmoid
    h = act(x @ params["w1"] + params["b1"])
    h = act(h @ params["w2"] + params["b2"])
    h = act(h @ params["w3"] + params["b3"])
    return h @ params["w4"] + params["b4"]


if __name__ == "__main__":
    key = jax.random.PRNGKey(0)
    kx, kp = jax.random.split(key)

    batch, input_dim, hidden_dim, output_dim = 8, 16, 32, 8
    x = jax.random.normal(kx, (batch, input_dim), jnp.float32)
    params = init_params(kp, input_dim, hidden_dim, output_dim)

    # One-time weight packing outside the per-call path.
    packed = pack_params(params)

    for nl in ("relu", "sigmoid"):
        for mode in ("fused", "tiled"):   # exercise both code paths
            fwd = jax.jit(functools.partial(
                deep_ffnn_forward, output_dim=output_dim,
                non_linearity=nl, mode=mode))
            out = jax.block_until_ready(fwd(x, packed))
            ref = _reference_forward(x, params, non_linearity=nl)
            assert out.shape == (batch, output_dim), out.shape
            max_err = float(jnp.max(jnp.abs(out - ref)))
            # bf16 MXU operands with f32 accumulation (+ approx sigmoid
            # reciprocal) -> small numeric drift vs the f32 reference.
            assert jnp.allclose(out, ref, atol=3e-2, rtol=3e-2), (nl, mode, max_err)

    print("KERNEL_OK")
</pallas_src>

<mosaic_0001>
module attributes {stable_mosaic.version = 11 : i64} {
  func.func @_fused_mlp_kernel(%arg0: i32, %arg1: memref<16x128xf32, #tpu.memory_space<vmem>>, %arg2: memref<128x128xbf16, #tpu.memory_space<vmem>>, %arg3: memref<1x128xf32, #tpu.memory_space<vmem>>, %arg4: memref<128x128xbf16, #tpu.memory_space<vmem>>, %arg5: memref<1x128xf32, #tpu.memory_space<vmem>>, %arg6: memref<128x128xbf16, #tpu.memory_space<vmem>>, %arg7: memref<1x128xf32, #tpu.memory_space<vmem>>, %arg8: memref<128x128xbf16, #tpu.memory_space<vmem>>, %arg9: memref<1x128xf32, #tpu.memory_space<vmem>>, %arg10: memref<16x128xf32, #tpu.memory_space<vmem>>) attributes {dimension_semantics = [#tpu.dimension_semantics<arbitrary>], iteration_bounds = array<i64: 1>, scalar_prefetch = 0 : i64, scratch_operands = 0 : i64, tpu.core_type = #tpu.core_type<tc>, window_params = [{transform_indices = @transform_0, window_bounds = array<i64: 16, 128>}, {pipeline_mode = #tpu.pipeline_mode<synchronous>, transform_indices = @transform_1, window_bounds = array<i64: 128, 128>}, {pipeline_mode = #tpu.pipeline_mode<synchronous>, transform_indices = @transform_2, window_bounds = array<i64: 1, 128>}, {pipeline_mode = #tpu.pipeline_mode<synchronous>, transform_indices = @transform_3, window_bounds = array<i64: 128, 128>}, {pipeline_mode = #tpu.pipeline_mode<synchronous>, transform_indices = @transform_4, window_bounds = array<i64: 1, 128>}, {pipeline_mode = #tpu.pipeline_mode<synchronous>, transform_indices = @transform_5, window_bounds = array<i64: 128, 128>}, {pipeline_mode = #tpu.pipeline_mode<synchronous>, transform_indices = @transform_6, window_bounds = array<i64: 1, 128>}, {pipeline_mode = #tpu.pipeline_mode<synchronous>, transform_indices = @transform_7, window_bounds = array<i64: 128, 128>}, {pipeline_mode = #tpu.pipeline_mode<synchronous>, transform_indices = @transform_8, window_bounds = array<i64: 1, 128>}, {transform_indices = @transform_9, window_bounds = array<i64: 16, 128>}]} {
    %c0 = arith.constant 0 : index
    %c0_0 = arith.constant 0 : index
    %0 = vector.load %arg1[%c0, %c0_0] : memref<16x128xf32, #tpu.memory_space<vmem>>, vector<16x128xf32>
    %1 = arith.truncf %0 : vector<16x128xf32> to vector<16x128xbf16>
    %c0_1 = arith.constant 0 : index
    %c0_2 = arith.constant 0 : index
    %2 = vector.load %arg2[%c0_1, %c0_2] : memref<128x128xbf16, #tpu.memory_space<vmem>>, vector<128x128xbf16>
    %cst = arith.constant dense<0.000000e+00> : vector<16x128xf32>
    %3 = tpu.matmul %1, %2, %cst {dimension_numbers = #tpu.dot_dimension_numbers<[1], [0], [0], [1], [0, 0, 1, 1], [], []>} : vector<16x128xbf16>, vector<128x128xbf16>, vector<16x128xf32> -> vector<16x128xf32>
    %c0_3 = arith.constant 0 : index
    %c0_4 = arith.constant 0 : index
    %4 = vector.load %arg3[%c0_3, %c0_4] : memref<1x128xf32, #tpu.memory_space<vmem>>, vector<1x128xf32>
    %5 = vector.broadcast %4 : vector<1x128xf32> to vector<16x128xf32>
    %6 = arith.addf %3, %5 : vector<16x128xf32>
    %cst_5 = arith.constant 0.000000e+00 : f32
    %7 = vector.broadcast %cst_5 : f32 to vector<16x128xf32>
    %8 = arith.maximumf %6, %7 : vector<16x128xf32>
    %9 = arith.truncf %8 : vector<16x128xf32> to vector<16x128xbf16>
    %c0_6 = arith.constant 0 : index
    %c0_7 = arith.constant 0 : index
    %10 = vector.load %arg4[%c0_6, %c0_7] : memref<128x128xbf16, #tpu.memory_space<vmem>>, vector<128x128xbf16>
    %cst_8 = arith.constant dense<0.000000e+00> : vector<16x128xf32>
    %11 = tpu.matmul %9, %10, %cst_8 {dimension_numbers = #tpu.dot_dimension_numbers<[1], [0], [0], [1], [0, 0, 1, 1], [], []>} : vector<16x128xbf16>, vector<128x128xbf16>, vector<16x128xf32> -> vector<16x128xf32>
    %c0_9 = arith.constant 0 : index
    %c0_10 = arith.constant 0 : index
    %12 = vector.load %arg5[%c0_9, %c0_10] : memref<1x128xf32, #tpu.memory_space<vmem>>, vector<1x128xf32>
    %13 = vector.broadcast %12 : vector<1x128xf32> to vector<16x128xf32>
    %14 = arith.addf %11, %13 : vector<16x128xf32>
    %cst_11 = arith.constant 0.000000e+00 : f32
    %15 = vector.broadcast %cst_11 : f32 to vector<16x128xf32>
    %16 = arith.maximumf %14, %15 : vector<16x128xf32>
    %17 = arith.truncf %16 : vector<16x128xf32> to vector<16x128xbf16>
    %c0_12 = arith.constant 0 : index
    %c0_13 = arith.constant 0 : index
    %18 = vector.load %arg6[%c0_12, %c0_13] : memref<128x128xbf16, #tpu.memory_space<vmem>>, vector<128x128xbf16>
    %cst_14 = arith.constant dense<0.000000e+00> : vector<16x128xf32>
    %19 = tpu.matmul %17, %18, %cst_14 {dimension_numbers = #tpu.dot_dimension_numbers<[1], [0], [0], [1], [0, 0, 1, 1], [], []>} : vector<16x128xbf16>, vector<128x128xbf16>, vector<16x128xf32> -> vector<16x128xf32>
    %c0_15 = arith.constant 0 : index
    %c0_16 = arith.constant 0 : index
    %20 = vector.load %arg7[%c0_15, %c0_16] : memref<1x128xf32, #tpu.memory_space<vmem>>, vector<1x128xf32>
    %21 = vector.broadcast %20 : vector<1x128xf32> to vector<16x128xf32>
    %22 = arith.addf %19, %21 : vector<16x128xf32>
    %cst_17 = arith.constant 0.000000e+00 : f32
    %23 = vector.broadcast %cst_17 : f32 to vector<16x128xf32>
    %24 = arith.maximumf %22, %23 : vector<16x128xf32>
    %25 = arith.truncf %24 : vector<16x128xf32> to vector<16x128xbf16>
    %c0_18 = arith.constant 0 : index
    %c0_19 = arith.constant 0 : index
    %26 = vector.load %arg8[%c0_18, %c0_19] : memref<128x128xbf16, #tpu.memory_space<vmem>>, vector<128x128xbf16>
    %cst_20 = arith.constant dense<0.000000e+00> : vector<16x128xf32>
    %27 = tpu.matmul %25, %26, %cst_20 {dimension_numbers = #tpu.dot_dimension_numbers<[1], [0], [0], [1], [0, 0, 1, 1], [], []>} : vector<16x128xbf16>, vector<128x128xbf16>, vector<16x128xf32> -> vector<16x128xf32>
    %c0_21 = arith.constant 0 : index
    %c0_22 = arith.constant 0 : index
    %28 = vector.load %arg9[%c0_21, %c0_22] : memref<1x128xf32, #tpu.memory_space<vmem>>, vector<1x128xf32>
    %29 = vector.broadcast %28 : vector<1x128xf32> to vector<16x128xf32>
    %30 = arith.addf %27, %29 : vector<16x128xf32>
    %c0_23 = arith.constant 0 : index
    %c0_24 = arith.constant 0 : index
    %31 = vector.load %arg10[%c0_23, %c0_24] : memref<16x128xf32, #tpu.memory_space<vmem>>, vector<16x128xf32>
    tpu.vector_store %arg10[%c0_23, %c0_24], %30 {strides = array<i32>} : memref<16x128xf32, #tpu.memory_space<vmem>>, vector<16x128xf32>,
    return
  }
  func.func @transform_0(%arg0: i32) -> (i32, i32) {
    %c0_i32 = arith.constant 0 : i32
    %c0_i32_0 = arith.constant 0 : i32
    return %arg0, %c0_i32 : i32, i32
  }
  func.func @transform_1(%arg0: i32) -> (i32, i32) {
    %c0_i32 = arith.constant 0 : i32
    %c0_i32_0 = arith.constant 0 : i32
    %c0_i32_1 = arith.constant 0 : i32
    return %c0_i32, %c0_i32_0 : i32, i32
  }
  func.func @transform_2(%arg0: i32) -> (i32, i32) {
    %c0_i32 = arith.constant 0 : i32
    %c0_i32_0 = arith.constant 0 : i32
    %c0_i32_1 = arith.constant 0 : i32
    return %c0_i32, %c0_i32_0 : i32, i32
  }
  func.func @transform_3(%arg0: i32) -> (i32, i32) {
    %c0_i32 = arith.constant 0 : i32
    %c0_i32_0 = arith.constant 0 : i32
    %c0_i32_1 = arith.constant 0 : i32
    return %c0_i32, %c0_i32_0 : i32, i32
  }
  func.func @transform_4(%arg0: i32) -> (i32, i32) {
    %c0_i32 = arith.constant 0 : i32
    %c0_i32_0 = arith.constant 0 : i32
    %c0_i32_1 = arith.constant 0 : i32
    return %c0_i32, %c0_i32_0 : i32, i32
  }
  func.func @transform_5(%arg0: i32) -> (i32, i32) {
    %c0_i32 = arith.constant 0 : i32
    %c0_i32_0 = arith.constant 0 : i32
    %c0_i32_1 = arith.constant 0 : i32
    return %c0_i32, %c0_i32_0 : i32, i32
  }
  func.func @transform_6(%arg0: i32) -> (i32, i32) {
    %c0_i32 = arith.constant 0 : i32
    %c0_i32_0 = arith.constant 0 : i32
    %c0_i32_1 = arith.constant 0 : i32
    return %c0_i32, %c0_i32_0 : i32, i32
  }
  func.func @transform_7(%arg0: i32) -> (i32, i32) {
    %c0_i32 = arith.constant 0 : i32
    %c0_i32_0 = arith.constant 0 : i32
    %c0_i32_1 = arith.constant 0 : i32
    return %c0_i32, %c0_i32_0 : i32, i32
  }
  func.func @transform_8(%arg0: i32) -> (i32, i32) {
    %c0_i32 = arith.constant 0 : i32
    %c0_i32_0 = arith.constant 0 : i32
    %c0_i32_1 = arith.constant 0 : i32
    return %c0_i32, %c0_i32_0 : i32, i32
  }
  func.func @transform_9(%arg0: i32) -> (i32, i32) {
    %c0_i32 = arith.constant 0 : i32
    %c0_i32_0 = arith.constant 0 : i32
    return %arg0, %c0_i32 : i32, i32
  }
}

</mosaic_0001>

<llo_original>
// kernel: deep_ffnn_forward.1
$region0: #{deep_ffnn_forward.1}
  #allocation0 [shape = 'u32[]', space=smem, size = 0x4, offset = 0x4, fixed_abs, tag = 'smem constant byte address 0x4 - core index']
  #allocation1 [shape = 'u32[144,128]{1,0:T(1,128)}', space=vmem, size = 0x12000, scoped, tag = 'internal scratch']
  %s0 = inlined_call_operand.vmem [shape: f32[16,128], index: 0, kind: input, shape index: {}]
  %s1 = inlined_call_operand.hbm [shape: bf16[128,128], index: 1, kind: input, shape index: {}]
  %s2 = inlined_call_operand.vmem [shape: f32[1,128], index: 2, kind: input, shape index: {}]
  %s3 = inlined_call_operand.hbm [shape: bf16[128,128], index: 3, kind: input, shape index: {}]
  %s4 = inlined_call_operand.vmem [shape: f32[1,128], index: 4, kind: input, shape index: {}]
  %s5 = inlined_call_operand.hbm [shape: bf16[128,128], index: 5, kind: input, shape index: {}]
  %s6 = inlined_call_operand.vmem [shape: f32[1,128], index: 6, kind: input, shape index: {}]
  %s7 = inlined_call_operand.hbm [shape: bf16[128,128], index: 7, kind: input, shape index: {}]
  %s8 = inlined_call_operand.vmem [shape: f32[1,128], index: 8, kind: input, shape index: {}]
  %s9 = inlined_call_operand.vmem [shape: f32[16,128], index: 9, kind: output, shape index: {}]
  %s10 = sld [smem:[#allocation0]]
  $region62: #{deep_ffnn_forward.1} parent=0
    _
  %s12 = ssub.s32 1, %s10
  %s13 = scalar_select 0, %s12, %s10
  $region1: #{deep_ffnn_forward.1} parent=0
    #allocation2 [shape = 'u8[32768]{0}', space=vmem, size = 0x8000, scoped, tag = 'input window, operand 1, single buffered']
    #allocation3 [shape = 's32[1]{0}', space=sflag, size = 0x4, scoped, tag = 'scoped memory for deep_ffnn_forward.1']
    #allocation4 [shape = 'u8[32768]{0}', space=vmem, size = 0x8000, scoped, tag = 'input window, operand 3, single buffered']
    #allocation5 [shape = 's32[1]{0}', space=sflag, size = 0x4, scoped, tag = 'scoped memory for deep_ffnn_forward.1']
    #allocation6 [shape = 'u8[32768]{0}', space=vmem, size = 0x8000, scoped, tag = 'input window, operand 5, single buffered']
    #allocation7 [shape = 'u8[32768]{0}', space=vmem, size = 0x8000, scoped, tag = 'input window, operand 7, single buffered']
    #allocation8 [shape = 's32[1]{0}', space=sflag, size = 0x4, scoped, tag = 'scoped memory for deep_ffnn_forward.1']
    %14 = vsyncpa [#allocation3], 0
    %15 = vsyncpa [#allocation5], 0
    %16 = vsyncpa [#allocation8], 0
    // Predicated region
    $region2: #{deep_ffnn_forward.1} parent=1 // pred_check
      _
    $region3: #{deep_ffnn_forward.1} parent=1 // pred_check_branch
      %18 = sbr.rel (0) target = $region5
    $region4: #{deep_ffnn_forward.1} parent=1 // pred_region
      _
    $region5: #{deep_ffnn_forward.1} parent=1 // pred_fallthru
      _
    // Predicated region
    $region6: #{deep_ffnn_forward.1} parent=1 // pred_check
      _
    $region7: #{deep_ffnn_forward.1} parent=1 // pred_check_branch
      %20 = sbr.rel (0) target = $region9
    $region8: #{deep_ffnn_forward.1} parent=1 // pred_region
      %s22 = ssub.s32 1024, 1024
      %23 = vsyncadd [#allocation3], %s22
      %s24 = sshll.u32 [#allocation2], 4
      %s25 = int_to_ptr.vmem [resolvable:$true] %s24
      %30 = dma.hbm_to_vmem [thread:$0]  %s1, 1024, %s25, [#allocation3], 64, 64, 4
    $region9: #{deep_ffnn_forward.1} parent=1 // pred_fallthru
      _
    // Predicated region
    $region10: #{deep_ffnn_forward.1} parent=1 // pred_check
      _
    $region11: #{deep_ffnn_forward.1} parent=1 // pred_check_branch
      %32 = sbr.rel (0) target = $region13
    $region12: #{deep_ffnn_forward.1} parent=1 // pred_region
      _
    $region13: #{deep_ffnn_forward.1} parent=1 // pred_fallthru
      _
    // Predicated region
    $region14: #{deep_ffnn_forward.1} parent=1 // pred_check
      _
    $region15: #{deep_ffnn_forward.1} parent=1 // pred_check_branch
      %34 = sbr.rel (0) target = $region17
    $region16: #{deep_ffnn_forward.1} parent=1 // pred_region
      %s36 = ssub.s32 1024, 1024
      %37 = vsyncadd [#allocation5], %s36
      %s38 = sshll.u32 [#allocation4], 4
      %s39 = int_to_ptr.vmem [resolvable:$true] %s38
      %44 = dma.hbm_to_vmem [thread:$0]  %s3, 1024, %s39, [#allocation5], 64, 64, 4
    $region17: #{deep_ffnn_forward.1} parent=1 // pred_fallthru
      _
    // Predicated region
    $region18: #{deep_ffnn_forward.1} parent=1 // pred_check
      _
    $region19: #{deep_ffnn_forward.1} parent=1 // pred_check_branch
      %46 = sbr.rel (0) target = $region21
    $region20: #{deep_ffnn_forward.1} parent=1 // pred_region
      _
    $region21: #{deep_ffnn_forward.1} parent=1 // pred_fallthru
      _
    // Predicated region
    $region22: #{deep_ffnn_forward.1} parent=1 // pred_check
      _
    $region23: #{deep_ffnn_forward.1} parent=1 // pred_check_branch
      %48 = sbr.rel (0) target = $region25
    $region24: #{deep_ffnn_forward.1} parent=1 // pred_region
      %s50 = ssub.s32 1024, 1024
      %51 = vsyncadd [#allocation5], %s50
      %s52 = sshll.u32 [#allocation6], 4
      %s53 = int_to_ptr.vmem [resolvable:$true] %s52
      %58 = dma.hbm_to_vmem [thread:$0]  %s5, 1024, %s53, [#allocation5], 64, 64, 4
    $region25: #{deep_ffnn_forward.1} parent=1 // pred_fallthru
      _
    // Predicated region
    $region26: #{deep_ffnn_forward.1} parent=1 // pred_check
      _
    $region27: #{deep_ffnn_forward.1} parent=1 // pred_check_branch
      %60 = sbr.rel (0) target = $region29
    $region28: #{deep_ffnn_forward.1} parent=1 // pred_region
      _
    $region29: #{deep_ffnn_forward.1} parent=1 // pred_fallthru
      _
    // Predicated region
    $region30: #{deep_ffnn_forward.1} parent=1 // pred_check
      _
    $region31: #{deep_ffnn_forward.1} parent=1 // pred_check_branch
      %62 = sbr.rel (0) target = $region33
    $region32: #{deep_ffnn_forward.1} parent=1 // pred_region
      %s64 = ssub.s32 1024, 1024
      %65 = vsyncadd [#allocation8], %s64
      %s66 = sshll.u32 [#allocation7], 4
      %s67 = int_to_ptr.vmem [resolvable:$true] %s66
      %72 = dma.hbm_to_vmem [thread:$0]  %s7, 1024, %s67, [#allocation8], 64, 64, 4
    $region33: #{deep_ffnn_forward.1} parent=1 // pred_fallthru
      _
    // Predicated region
    $region34: #{deep_ffnn_forward.1} parent=1 // pred_check
      _
    $region35: #{deep_ffnn_forward.1} parent=1 // pred_check_branch
      %74 = sbr.rel (0) target = $region37
    $region36: #{deep_ffnn_forward.1} parent=1 // pred_region
      _
    $region37: #{deep_ffnn_forward.1} parent=1 // pred_fallthru
      _
    // Predicated region
    $region38: #{deep_ffnn_forward.1} parent=1 // pred_check
      _
    $region39: #{deep_ffnn_forward.1} parent=1 // pred_check_branch
      %76 = sbr.rel (0) target = $region41
    $region40: #{deep_ffnn_forward.1} parent=1 // pred_region
      %77 = dma.done [#allocation3], 1024
    $region41: #{deep_ffnn_forward.1} parent=1 // pred_fallthru
      _
    // Predicated region
    $region42: #{deep_ffnn_forward.1} parent=1 // pred_check
      _
    $region43: #{deep_ffnn_forward.1} parent=1 // pred_check_branch
      %79 = sbr.rel (0) target = $region45
    $region44: #{deep_ffnn_forward.1} parent=1 // pred_region
      %80 = dma.done [#allocation5], 1024
    $region45: #{deep_ffnn_forward.1} parent=1 // pred_fallthru
      _
    // Predicated region
    $region46: #{deep_ffnn_forward.1} parent=1 // pred_check
      _
    $region47: #{deep_ffnn_forward.1} parent=1 // pred_check_branch
      %82 = sbr.rel (0) target = $region49
    $region48: #{deep_ffnn_forward.1} parent=1 // pred_region
      %83 = dma.done [#allocation5], 1024
    $region49: #{deep_ffnn_forward.1} parent=1 // pred_fallthru
      _
    // Predicated region
    $region50: #{deep_ffnn_forward.1} parent=1 // pred_check
      _
    $region51: #{deep_ffnn_forward.1} parent=1 // pred_check_branch
      %85 = sbr.rel (0) target = $region53
    $region52: #{deep_ffnn_forward.1} parent=1 // pred_region
      %86 = dma.done [#allocation8], 1024
    $region53: #{deep_ffnn_forward.1} parent=1 // pred_fallthru
      _
    %v88 = vld [vmem:[%s0] sm:$0xff]
    %v89 = vld [vmem:[%s0 + $0x8] sm:$0xff]
    %v90 = vpack.c.bf16 %v89, %v88
    %v91 = vld [vmem:[#allocation2] sm:$0xf]
    %v92 = vld [vmem:[#allocation2 + $0x4] sm:$0xf]
    %v93 = vld [vmem:[#allocation2 + $0x8] sm:$0xf]
    %v94 = vld [vmem:[#allocation2 + $0xc] sm:$0xf]
    %v95 = vld [vmem:[#allocation2 + $0x10] sm:$0xf]
    %v96 = vld [vmem:[#allocation2 + $0x14] sm:$0xf]
    %v97 = vld [vmem:[#allocation2 + $0x18] sm:$0xf]
    %v98 = vld [vmem:[#allocation2 + $0x1c] sm:$0xf]
    %v99 = vld [vmem:[#allocation2 + $0x20] sm:$0xf]
    %v100 = vld [vmem:[#allocation2 + $0x24] sm:$0xf]
    %v101 = vld [vmem:[#allocation2 + $0x28] sm:$0xf]
    %v102 = vld [vmem:[#allocation2 + $0x2c] sm:$0xf]
    %v103 = vld [vmem:[#allocation2 + $0x30] sm:$0xf]
    %v104 = vld [vmem:[#allocation2 + $0x34] sm:$0xf]
    %v105 = vld [vmem:[#allocation2 + $0x38] sm:$0xf]
    %v106 = vld [vmem:[#allocation2 + $0x3c] sm:$0xf]
    %v107 = vld [vmem:[%s2] sm:$0x1]
    %v109 = vlaneseq
    %v110 = vshrl.u32 %v109, 7
    %v111 = vsub.s32 0, %v110
    %v112 = vrot.slane %v107, %v111
    %v130 = vunpack.c.l.b16 %v91
    %v131 = vunpack.c.l.b16 %v92
    %v132 = vunpack.c.l.b16 %v93
    %v133 = vunpack.c.l.b16 %v94
    %v134 = vunpack.c.l.b16 %v95
    %v135 = vunpack.c.l.b16 %v96
    %v136 = vunpack.c.l.b16 %v97
    %v137 = vunpack.c.l.b16 %v98
    %v138 = vunpack.c.l.b16 %v99
    %v139 = vunpack.c.l.b16 %v100
    %v140 = vunpack.c.l.b16 %v101
    %v141 = vunpack.c.l.b16 %v102
    %v142 = vunpack.c.l.b16 %v103
    %v143 = vunpack.c.l.b16 %v104
    %v144 = vunpack.c.l.b16 %v105
    %v145 = vunpack.c.l.b16 %v106
    %v146 = vpack.c.b16 %v131, %v130
    %v147 = vpack.c.b16 %v133, %v132
    %v148 = vpack.c.b16 %v135, %v134
    %v149 = vpack.c.b16 %v137, %v136
    %v150 = vpack.c.b16 %v139, %v138
    %v151 = vpack.c.b16 %v141, %v140
    %v152 = vpack.c.b16 %v143, %v142
    %v153 = vpack.c.b16 %v145, %v144
    %162 = vmatprep.subr.bf16.mxu0 0
    %163 = vmatpush1.bf16.msra.mxu0 %v153
    %164 = vmatprep.subr.bf16.mxu0 0
    %165 = vmatpush1.bf16.msra.mxu0 %v152
    %166 = vmatprep.subr.bf16.mxu0 0
    %167 = vmatpush1.bf16.msra.mxu0 %v151
    %168 = vmatprep.subr.bf16.mxu0 0
    %169 = vmatpush1.bf16.msra.mxu0 %v150
    %170 = vmatprep.subr.bf16.mxu0 0
    %171 = vmatpush1.bf16.msra.mxu0 %v149
    %172 = vmatprep.subr.bf16.mxu0 0
    %173 = vmatpush1.bf16.msra.mxu0 %v148
    %174 = vmatprep.subr.bf16.mxu0 0
    %175 = vmatpush1.bf16.msra.mxu0 %v147
    %176 = vmatprep.subr.bf16.mxu0 0
    %177 = vmatpush1.bf16.msra.mxu0 %v146
    %178 = vmatprep.subr.bf16.mxu0 0
    %179 = vmatpush2.bf16.msra.mxu0 0
    %180 = vmatprep.subr.bf16.mxu0 0
    %181 = vmatpush2.bf16.msra.mxu0 0
    %182 = vmatprep.subr.bf16.mxu0 0
    %183 = vmatpush2.bf16.msra.mxu0 0
    %184 = vmatprep.subr.bf16.mxu0 0
    %185 = vmatpush2.bf16.msra.mxu0 0
    %186 = vmatprep.subr.bf16.mxu0 0
    %187 = vmatpush2.bf16.msra.mxu0 0
    %188 = vmatprep.subr.bf16.mxu0 0
    %189 = vmatpush2.bf16.msra.mxu0 0
    %190 = vmatprep.subr.bf16.mxu0 0
    %191 = vmatpush2.bf16.msra.mxu0 0
    %192 = vmatprep.subr.bf16.mxu0 0
    %193 = vmatpush2.bf16.msra.mxu0 0
    %194 = vmatprep.mubr.bf16.mxu0 0
    %195 = vmatmul.mubr.bf16.gmra.mxu0 %v90
    %v196 = vpop.f32.mrf.mxu0
    %v197 = vadd.f32 %v112, %v196
    %v198 = vpop.f32.mrf.mxu0
    %v199 = vpop.f32.mrf.mxu0
    %v200 = vadd.f32 %v112, %v199
    %v201 = vpop.f32.mrf.mxu0
    %202 = vdwg.mxu0
    %v203 = vmax.f32 %v197, 0.0
    %v204 = vmax.f32 %v200, 0.0
    %v205 = vpack.c.bf16 %v204, %v203
    %v206 = vld [vmem:[#allocation4] sm:$0xf]
    %v207 = vld [vmem:[#allocation4 + $0x4] sm:$0xf]
    %v208 = vld [vmem:[#allocation4 + $0x8] sm:$0xf]
    %v209 = vld [vmem:[#allocation4 + $0xc] sm:$0xf]
    %v210 = vld [vmem:[#allocation4 + $0x10] sm:$0xf]
    %v211 = vld [vmem:[#allocation4 + $0x14] sm:$0xf]
    %v212 = vld [vmem:[#allocation4 + $0x18] sm:$0xf]
    %v213 = vld [vmem:[#allocation4 + $0x1c] sm:$0xf]
    %v214 = vld [vmem:[#allocation4 + $0x20] sm:$0xf]
    %v215 = vld [vmem:[#allocation4 + $0x24] sm:$0xf]
    %v216 = vld [vmem:[#allocation4 + $0x28] sm:$0xf]
    %v217 = vld [vmem:[#allocation4 + $0x2c] sm:$0xf]
    %v218 = vld [vmem:[#allocation4 + $0x30] sm:$0xf]
    %v219 = vld [vmem:[#allocation4 + $0x34] sm:$0xf]
    %v220 = vld [vmem:[#allocation4 + $0x38] sm:$0xf]
    %v221 = vld [vmem:[#allocation4 + $0x3c] sm:$0xf]
    %v222 = vld [vmem:[%s4] sm:$0x1]
    %v224 = vlaneseq
    %v225 = vshrl.u32 %v224, 7
    %v226 = vsub.s32 0, %v225
    %v227 = vrot.slane %v222, %v226
    %v245 = vunpack.c.l.b16 %v206
    %v246 = vunpack.c.l.b16 %v207
    %v247 = vunpack.c.l.b16 %v208
    %v248 = vunpack.c.l.b16 %v209
    %v249 = vunpack.c.l.b16 %v210
    %v250 = vunpack.c.l.b16 %v211
    %v251 = vunpack.c.l.b16 %v212
    %v252 = vunpack.c.l.b16 %v213
    %v253 = vunpack.c.l.b16 %v214
    %v254 = vunpack.c.l.b16 %v215
    %v255 = vunpack.c.l.b16 %v216
    %v256 = vunpack.c.l.b16 %v217
    %v257 = vunpack.c.l.b16 %v218
    %v258 = vunpack.c.l.b16 %v219
    %v259 = vunpack.c.l.b16 %v220
    %v260 = vunpack.c.l.b16 %v221
    %v261 = vpack.c.b16 %v246, %v245
    %v262 = vpack.c.b16 %v248, %v247
    %v263 = vpack.c.b16 %v250, %v249
    %v264 = vpack.c.b16 %v252, %v251
    %v265 = vpack.c.b16 %v254, %v253
    %v266 = vpack.c.b16 %v256, %v255
    %v267 = vpack.c.b16 %v258, %v257
    %v268 = vpack.c.b16 %v260, %v259
    %277 = vmatprep.subr.bf16.mxu0 0
    %278 = vmatpush1.bf16.msra.mxu0 %v268
    %279 = vmatprep.subr.bf16.mxu0 0
    %280 = vmatpush1.bf16.msra.mxu0 %v267
    %281 = vmatprep.subr.bf16.mxu0 0
    %282 = vmatpush1.bf16.msra.mxu0 %v266
    %283 = vmatprep.subr.bf16.mxu0 0
    %284 = vmatpush1.bf16.msra.mxu0 %v265
    %285 = vmatprep.subr.bf16.mxu0 0
    %286 = vmatpush1.bf16.msra.mxu0 %v264
    %287 = vmatprep.subr.bf16.mxu0 0
    %288 = vmatpush1.bf16.msra.mxu0 %v263
    %289 = vmatprep.subr.bf16.mxu0 0
    %290 = vmatpush1.bf16.msra.mxu0 %v262
    %291 = vmatprep.subr.bf16.mxu0 0
    %292 = vmatpush1.bf16.msra.mxu0 %v261
    %293 = vmatprep.subr.bf16.mxu0 0
    %294 = vmatpush2.bf16.msra.mxu0 0
    %295 = vmatprep.subr.bf16.mxu0 0
    %296 = vmatpush2.bf16.msra.mxu0 0
    %297 = vmatprep.subr.bf16.mxu0 0
    %298 = vmatpush2.bf16.msra.mxu0 0
    %299 = vmatprep.subr.bf16.mxu0 0
    %300 = vmatpush2.bf16.msra.mxu0 0
    %301 = vmatprep.subr.bf16.mxu0 0
    %302 = vmatpush2.bf16.msra.mxu0 0
    %303 = vmatprep.subr.bf16.mxu0 0
    %304 = vmatpush2.bf16.msra.mxu0 0
    %305 = vmatprep.subr.bf16.mxu0 0
    %306 = vmatpush2.bf16.msra.mxu0 0
    %307 = vmatprep.subr.bf16.mxu0 0
    %308 = vmatpush2.bf16.msra.mxu0 0
    %309 = vmatprep.mubr.bf16.mxu0 0
    %310 = vmatmul.mubr.bf16.gmra.mxu0 %v205
    %v311 = vpop.f32.mrf.mxu0
    %v312 = vadd.f32 %v227, %v311
    %v313 = vpop.f32.mrf.mxu0
    %v314 = vpop.f32.mrf.mxu0
    %v315 = vadd.f32 %v227, %v314
    %v316 = vpop.f32.mrf.mxu0
    %317 = vdwg.mxu0
    %v318 = vmax.f32 %v312, 0.0
    %v319 = vmax.f32 %v315, 0.0
    %v320 = vpack.c.bf16 %v319, %v318
    %v321 = vld [vmem:[#allocation6] sm:$0xf]
    %v322 = vld [vmem:[#allocation6 + $0x4] sm:$0xf]
    %v323 = vld [vmem:[#allocation6 + $0x8] sm:$0xf]
    %v324 = vld [vmem:[#allocation6 + $0xc] sm:$0xf]
    %v325 = vld [vmem:[#allocation6 + $0x10] sm:$0xf]
    %v326 = vld [vmem:[#allocation6 + $0x14] sm:$0xf]
    %v327 = vld [vmem:[#allocation6 + $0x18] sm:$0xf]
    %v328 = vld [vmem:[#allocation6 + $0x1c] sm:$0xf]
    %v329 = vld [vmem:[#allocation6 + $0x20] sm:$0xf]
    %v330 = vld [vmem:[#allocation6 + $0x24] sm:$0xf]
    %v331 = vld [vmem:[#allocation6 + $0x28] sm:$0xf]
    %v332 = vld [vmem:[#allocation6 + $0x2c] sm:$0xf]
    %v333 = vld [vmem:[#allocation6 + $0x30] sm:$0xf]
    %v334 = vld [vmem:[#allocation6 + $0x34] sm:$0xf]
    %v335 = vld [vmem:[#allocation6 + $0x38] sm:$0xf]
    %v336 = vld [vmem:[#allocation6 + $0x3c] sm:$0xf]
    %v337 = vld [vmem:[%s6] sm:$0x1]
    %v339 = vlaneseq
    %v340 = vshrl.u32 %v339, 7
    %v341 = vsub.s32 0, %v340
    %v342 = vrot.slane %v337, %v341
    %v360 = vunpack.c.l.b16 %v321
    %v361 = vunpack.c.l.b16 %v322
    %v362 = vunpack.c.l.b16 %v323
    %v363 = vunpack.c.l.b16 %v324
    %v364 = vunpack.c.l.b16 %v325
    %v365 = vunpack.c.l.b16 %v326
    %v366 = vunpack.c.l.b16 %v327
    %v367 = vunpack.c.l.b16 %v328
    %v368 = vunpack.c.l.b16 %v329
    %v369 = vunpack.c.l.b16 %v330
    %v370 = vunpack.c.l.b16 %v331
    %v371 = vunpack.c.l.b16 %v332
    %v372 = vunpack.c.l.b16 %v333
    %v373 = vunpack.c.l.b16 %v334
    %v374 = vunpack.c.l.b16 %v335
    %v375 = vunpack.c.l.b16 %v336
    %v376 = vpack.c.b16 %v361, %v360
    %v377 = vpack.c.b16 %v363, %v362
    %v378 = vpack.c.b16 %v365, %v364
    %v379 = vpack.c.b16 %v367, %v366
    %v380 = vpack.c.b16 %v369, %v368
    %v381 = vpack.c.b16 %v371, %v370
    %v382 = vpack.c.b16 %v373, %v372
    %v383 = vpack.c.b16 %v375, %v374
    %392 = vmatprep.subr.bf16.mxu0 0
    %393 = vmatpush1.bf16.msra.mxu0 %v383
    %394 = vmatprep.subr.bf16.mxu0 0
    %395 = vmatpush1.bf16.msra.mxu0 %v382
    %396 = vmatprep.subr.bf16.mxu0 0
    %397 = vmatpush1.bf16.msra.mxu0 %v381
    %398 = vmatprep.subr.bf16.mxu0 0
    %399 = vmatpush1.bf16.msra.mxu0 %v380
    %400 = vmatprep.subr.bf16.mxu0 0
    %401 = vmatpush1.bf16.msra.mxu0 %v379
    %402 = vmatprep.subr.bf16.mxu0 0
    %403 = vmatpush1.bf16.msra.mxu0 %v378
    %404 = vmatprep.subr.bf16.mxu0 0
    %405 = vmatpush1.bf16.msra.mxu0 %v377
    %406 = vmatprep.subr.bf16.mxu0 0
    %407 = vmatpush1.bf16.msra.mxu0 %v376
    %408 = vmatprep.subr.bf16.mxu0 0
    %409 = vmatpush2.bf16.msra.mxu0 0
    %410 = vmatprep.subr.bf16.mxu0 0
    %411 = vmatpush2.bf16.msra.mxu0 0
    %412 = vmatprep.subr.bf16.mxu0 0
    %413 = vmatpush2.bf16.msra.mxu0 0
    %414 = vmatprep.subr.bf16.mxu0 0
    %415 = vmatpush2.bf16.msra.mxu0 0
    %416 = vmatprep.subr.bf16.mxu0 0
    %417 = vmatpush2.bf16.msra.mxu0 0
    %418 = vmatprep.subr.bf16.mxu0 0
    %419 = vmatpush2.bf16.msra.mxu0 0
    %420 = vmatprep.subr.bf16.mxu0 0
    %421 = vmatpush2.bf16.msra.mxu0 0
    %422 = vmatprep.subr.bf16.mxu0 0
    %423 = vmatpush2.bf16.msra.mxu0 0
    %424 = vmatprep.mubr.bf16.mxu0 0
    %425 = vmatmul.mubr.bf16.gmra.mxu0 %v320
    %v426 = vpop.f32.mrf.mxu0
    %v427 = vadd.f32 %v342, %v426
    %v428 = vpop.f32.mrf.mxu0
    %v429 = vpop.f32.mrf.mxu0
    %v430 = vadd.f32 %v342, %v429
    %v431 = vpop.f32.mrf.mxu0
    %432 = vdwg.mxu0
    %v433 = vmax.f32 %v427, 0.0
    %v434 = vmax.f32 %v430, 0.0
    %v435 = vpack.c.bf16 %v434, %v433
    %v436 = vld [vmem:[#allocation7] sm:$0xf]
    %v437 = vld [vmem:[#allocation7 + $0x4] sm:$0xf]
    %v438 = vld [vmem:[#allocation7 + $0x8] sm:$0xf]
    %v439 = vld [vmem:[#allocation7 + $0xc] sm:$0xf]
    %v440 = vld [vmem:[#allocation7 + $0x10] sm:$0xf]
    %v441 = vld [vmem:[#allocation7 + $0x14] sm:$0xf]
    %v442 = vld [vmem:[#allocation7 + $0x18] sm:$0xf]
    %v443 = vld [vmem:[#allocation7 + $0x1c] sm:$0xf]
    %v444 = vld [vmem:[#allocation7 + $0x20] sm:$0xf]
    %v445 = vld [vmem:[#allocation7 + $0x24] sm:$0xf]
    %v446 = vld [vmem:[#allocation7 + $0x28] sm:$0xf]
    %v447 = vld [vmem:[#allocation7 + $0x2c] sm:$0xf]
    %v448 = vld [vmem:[#allocation7 + $0x30] sm:$0xf]
    %v449 = vld [vmem:[#allocation7 + $0x34] sm:$0xf]
    %v450 = vld [vmem:[#allocation7 + $0x38] sm:$0xf]
    %v451 = vld [vmem:[#allocation7 + $0x3c] sm:$0xf]
    %v452 = vld [vmem:[%s8] sm:$0x1]
    %v454 = vlaneseq
    %v455 = vshrl.u32 %v454, 7
    %v456 = vsub.s32 0, %v455
    %v457 = vrot.slane %v452, %v456
    %v475 = vunpack.c.l.b16 %v436
    %v476 = vunpack.c.l.b16 %v437
    %v477 = vunpack.c.l.b16 %v438
    %v478 = vunpack.c.l.b16 %v439
    %v479 = vunpack.c.l.b16 %v440
    %v480 = vunpack.c.l.b16 %v441
    %v481 = vunpack.c.l.b16 %v442
    %v482 = vunpack.c.l.b16 %v443
    %v483 = vunpack.c.l.b16 %v444
    %v484 = vunpack.c.l.b16 %v445
    %v485 = vunpack.c.l.b16 %v446
    %v486 = vunpack.c.l.b16 %v447
    %v487 = vunpack.c.l.b16 %v448
    %v488 = vunpack.c.l.b16 %v449
    %v489 = vunpack.c.l.b16 %v450
    %v490 = vunpack.c.l.b16 %v451
    %v491 = vpack.c.b16 %v476, %v475
    %v492 = vpack.c.b16 %v478, %v477
    %v493 = vpack.c.b16 %v480, %v479
    %v494 = vpack.c.b16 %v482, %v481
    %v495 = vpack.c.b16 %v484, %v483
    %v496 = vpack.c.b16 %v486, %v485
    %v497 = vpack.c.b16 %v488, %v487
    %v498 = vpack.c.b16 %v490, %v489
    %507 = vmatprep.subr.bf16.mxu0 0
    %508 = vmatpush1.bf16.msra.mxu0 %v498
    %509 = vmatprep.subr.bf16.mxu0 0
    %510 = vmatpush1.bf16.msra.mxu0 %v497
    %511 = vmatprep.subr.bf16.mxu0 0
    %512 = vmatpush1.bf16.msra.mxu0 %v496
    %513 = vmatprep.subr.bf16.mxu0 0
    %514 = vmatpush1.bf16.msra.mxu0 %v495
    %515 = vmatprep.subr.bf16.mxu0 0
    %516 = vmatpush1.bf16.msra.mxu0 %v494
    %517 = vmatprep.subr.bf16.mxu0 0
    %518 = vmatpush1.bf16.msra.mxu0 %v493
    %519 = vmatprep.subr.bf16.mxu0 0
    %520 = vmatpush1.bf16.msra.mxu0 %v492
    %521 = vmatprep.subr.bf16.mxu0 0
    %522 = vmatpush1.bf16.msra.mxu0 %v491
    %523 = vmatprep.subr.bf16.mxu0 0
    %524 = vmatpush2.bf16.msra.mxu0 0
    %525 = vmatprep.subr.bf16.mxu0 0
    %526 = vmatpush2.bf16.msra.mxu0 0
    %527 = vmatprep.subr.bf16.mxu0 0
    %528 = vmatpush2.bf16.msra.mxu0 0
    %529 = vmatprep.subr.bf16.mxu0 0
    %530 = vmatpush2.bf16.msra.mxu0 0
    %531 = vmatprep.subr.bf16.mxu0 0
    %532 = vmatpush2.bf16.msra.mxu0 0
    %533 = vmatprep.subr.bf16.mxu0 0
    %534 = vmatpush2.bf16.msra.mxu0 0
    %535 = vmatprep.subr.bf16.mxu0 0
    %536 = vmatpush2.bf16.msra.mxu0 0
    %537 = vmatprep.subr.bf16.mxu0 0
    %538 = vmatpush2.bf16.msra.mxu0 0
    %539 = vmatprep.mubr.bf16.mxu0 0
    %540 = vmatmul.mubr.bf16.gmra.mxu0 %v435
    %v541 = vpop.f32.mrf.mxu0
    %v542 = vadd.f32 %v457, %v541
    %v543 = vpop.f32.mrf.mxu0
    %v544 = vpop.f32.mrf.mxu0
    %v545 = vadd.f32 %v457, %v544
    %v546 = vpop.f32.mrf.mxu0
    %547 = vdwg.mxu0
    %548 = vst [vmem:[%s9] sm:$0xff] %v542
    %549 = vst [vmem:[%s9 + $0x8] sm:$0xff] %v545
    // Predicated region
    $region54: #{deep_ffnn_forward.1} parent=1 // pred_check
      _
    $region55: #{deep_ffnn_forward.1} parent=1 // pred_check_branch
      %551 = sbr.rel (0) target = $region57
    $region56: #{deep_ffnn_forward.1} parent=1 // pred_region
      _
    $region57: #{deep_ffnn_forward.1} parent=1 // pred_fallthru
      _
    // Predicated region
    $region58: #{deep_ffnn_forward.1} parent=1 // pred_check
      _
    $region59: #{deep_ffnn_forward.1} parent=1 // pred_check_branch
      %553 = sbr.rel (0) target = $region61
    $region60: #{deep_ffnn_forward.1} parent=1 // pred_region
      _
    $region61: #{deep_ffnn_forward.1} parent=1 // pred_fallthru
      _
    %554 = vsyncpa [#allocation3], 1
    %555 = vsyncpa [#allocation5], 1
    %556 = vsyncpa [#allocation8], 1

</llo_original>
